<compile_context>
chip_gen: v5e
topology: v5e:2x2
jax: 0.10.0
libtpu: 0.0.40
codegen_flags: <defaults>
</compile_context>

<pallas_src>
import functools

import numpy as np
import jax
import jax.numpy as jnp
from jax import lax
from jax.experimental import pallas as pl
from jax.experimental.pallas import tpu as pltpu


def _round_up(x, m):
    return (x + m - 1) // m * m


def _tap_shifts(W, n_lanes):
    """Lane-rotation amount per 3x3 tap for a (C, N*H*W)-flattened layout."""
    shifts = []
    for dy in (-1, 0, 1):
        for dx in (-1, 0, 1):
            shifts.append((-(dy * W + dx)) % n_lanes)
    return tuple(shifts)


def _tap_masks(H, W, N):
    """(9, N*H*W) 0/1 masks implementing zero 'same' padding per tap.

    The mask is identical for every image, so it is tiled N times along the
    lane axis; this also guarantees that any lane roll wrapping across an
    image boundary lands on a masked-out tap.
    """
    yy, xx = np.meshgrid(np.arange(H), np.arange(W), indexing="ij")
    masks = []
    for dy in (-1, 0, 1):
        for dx in (-1, 0, 1):
            valid = ((yy + dy >= 0) & (yy + dy < H) &
                     (xx + dx >= 0) & (xx + dx < W))
            masks.append(valid.reshape(-1))
    m = np.stack(masks).astype(np.float32)          # (9, HW)
    return np.tile(m, (1, N))                       # (9, N*HW)


def _last_block_kernel(x_ref, w1_ref, w2_ref, mask_ref, o_ref, *, shifts):
    """Fused relu(conv2(relu(conv1(x)))) for the whole batch-folded problem.

    x_ref    : (Cin_p, N*HW)      input, all pixels of all images on lanes
    w1_ref   : (Cout_p, 9*Cin_p)  conv1 weights, tap-major / channel-minor cols
    w2_ref   : (Cout_p, 9*Cout_p) conv2 weights
    mask_ref : (9, N*HW)          0/1 zero-padding masks per tap
    o_ref    : (Cout_p, N*HW)     output
    """
    x = x_ref[...]

    # Mask rows loaded once, shared by both tap loops (cheap VMEM vlds; the
    # sublane broadcast happens at the multiply).
    mrows = [mask_ref[pl.ds(t, 1), :] for t in range(9)]

    def im2col(a):
        # 9 rolled + masked slabs, concatenated along the 8-aligned sublane
        # axis entirely in registers -> one (9*C_p, N*HW) patch feeding the
        # MXU directly (no VMEM scratch store/reload).
        slabs = []
        for t, s in enumerate(shifts):
            shifted = pltpu.roll(a, shift=s, axis=1) if s else a
            slabs.append(shifted * mrows[t])
        return jnp.concatenate(slabs, axis=0)

    # conv1 + ReLU: single lane-dense MXU matmul, K = 9*Cin_p.
    h = jnp.maximum(
        jnp.dot(w1_ref[...], im2col(x),
                preferred_element_type=jnp.float32), 0.0)
    h = h.astype(x.dtype)

    # conv2 + ReLU on the in-register intermediate (never touches HBM).
    out = jnp.maximum(
        jnp.dot(w2_ref[...], im2col(h),
                preferred_element_type=jnp.float32), 0.0)
    o_ref[...] = out.astype(o_ref.dtype)


def last_block_forward(x_nchw, w1_oihw, w2_oihw):
    """Matches LastBlock.forward: relu(conv2(relu(conv1(x)))), NCHW in/out."""
    N, Cin, H, W = x_nchw.shape
    Cout = w1_oihw.shape[0]
    HW = H * W
    NHW = N * HW
    cin_p = _round_up(Cin, 8)        # 8-sublane-align each tap slab
    cout_p = _round_up(Cout, 8)
    dtype = x_nchw.dtype

    # Layout plumbing on tiny tensors (handled by XLA outside the kernel):
    # activations NCHW -> (Cin_p, N*HW): channels on sublanes (zero-padded to
    # a multiple of 8), all pixels of all images folded onto the lane axis.
    x = x_nchw.reshape(N, Cin, HW).transpose(1, 0, 2).reshape(Cin, NHW)
    x = jnp.pad(x, ((0, cin_p - Cin), (0, 0)))

    # Weights OIHW -> (Cout_p, 9*C_p), tap-major / channel-minor columns,
    # zero-padded so the padded patch rows / output rows contribute nothing.
    w1m = jnp.transpose(w1_oihw, (0, 2, 3, 1))                 # (O, 3, 3, I)
    w1m = jnp.pad(w1m, ((0, cout_p - Cout), (0, 0), (0, 0), (0, cin_p - Cin)))
    w1m = w1m.reshape(cout_p, 9 * cin_p).astype(dtype)
    w2m = jnp.transpose(w2_oihw, (0, 2, 3, 1))
    w2m = jnp.pad(w2m, ((0, cout_p - Cout), (0, 0), (0, 0), (0, cout_p - Cout)))
    w2m = w2m.reshape(cout_p, 9 * cout_p).astype(dtype)

    masks = jnp.asarray(_tap_masks(H, W, N)).astype(dtype)     # (9, N*HW)

    itemsize = jnp.dtype(dtype).itemsize
    flops = 2 * NHW * (9 * cin_p * cout_p + 9 * cout_p * cout_p)
    bytes_accessed = itemsize * (
        cin_p * NHW + cout_p * NHW + 9 * NHW
        + cout_p * 9 * cin_p + cout_p * 9 * cout_p)

    kernel = functools.partial(_last_block_kernel,
                               shifts=_tap_shifts(W, NHW))

    out = pl.pallas_call(
        kernel,
        out_shape=jax.ShapeDtypeStruct((cout_p, NHW), dtype),
        grid=(1,),
        in_specs=[
            pl.BlockSpec((cin_p, NHW), lambda i: (0, 0)),
            pl.BlockSpec((cout_p, 9 * cin_p), lambda i: (0, 0)),
            pl.BlockSpec((cout_p, 9 * cout_p), lambda i: (0, 0)),
            pl.BlockSpec((9, NHW), lambda i: (0, 0)),
        ],
        out_specs=pl.BlockSpec((cout_p, NHW), lambda i: (0, 0)),
        compiler_params=pltpu.CompilerParams(
            dimension_semantics=("arbitrary",)),
        cost_estimate=pl.CostEstimate(
            flops=flops, transcendentals=0, bytes_accessed=bytes_accessed),
    )(x, w1m, w2m, masks)

    # (Cout_p, N*HW) -> NCHW, dropping the channel padding.
    out = out[:Cout].reshape(Cout, N, HW).transpose(1, 0, 2)
    return out.reshape(N, Cout, H, W)


def init_params(key, in_channels, out_channels, dtype=jnp.float32):
    """Deterministic synthetic weights (PyTorch Conv2d shapes, OIHW, no bias)."""
    k1, k2 = jax.random.split(key)
    fan_in1 = in_channels * 9
    fan_in2 = out_channels * 9
    w1 = jax.random.uniform(
        k1, (out_channels, in_channels, 3, 3), dtype,
        minval=-1.0, maxval=1.0) / jnp.sqrt(fan_in1).astype(dtype)
    w2 = jax.random.uniform(
        k2, (out_channels, out_channels, 3, 3), dtype,
        minval=-1.0, maxval=1.0) / jnp.sqrt(fan_in2).astype(dtype)
    return w1, w2


if __name__ == "__main__":
    key = jax.random.PRNGKey(0)
    kx, kw = jax.random.split(key)

    N, Cin, Cout, H, W = 2, 4, 8, 16, 16
    x = jax.random.normal(kx, (N, Cin, H, W), dtype=jnp.float32)
    w1, w2 = init_params(kw, Cin, Cout)

    y = jax.jit(last_block_forward)(x, w1, w2)
    jax.block_until_ready(y)

    # Sanity check against plain-JAX reference (lax conv), same semantics.
    ref = jax.nn.relu(lax.conv_general_dilated(
        jax.nn.relu(lax.conv_general_dilated(
            x, w1, (1, 1), ((1, 1), (1, 1)),
            dimension_numbers=("NCHW", "OIHW", "NCHW"))),
        w2, (1, 1), ((1, 1), (1, 1)),
        dimension_numbers=("NCHW", "OIHW", "NCHW")))
    assert y.shape == (N, Cout, H, W)
    assert jnp.allclose(y, ref, atol=1e-4, rtol=1e-4)

    print("KERNEL_OK")
</pallas_src>

<mosaic_0001>
module attributes {stable_mosaic.version = 11 : i64} {
  func.func @_last_block_kernel(%arg0: i32, %arg1: memref<8x512xf32, #tpu.memory_space<vmem>>, %arg2: memref<8x72xf32, #tpu.memory_space<vmem>>, %arg3: memref<8x72xf32, #tpu.memory_space<vmem>>, %arg4: memref<9x512xf32, #tpu.memory_space<vmem>>, %arg5: memref<8x512xf32, #tpu.memory_space<vmem>>) attributes {dimension_semantics = [#tpu.dimension_semantics<arbitrary>], iteration_bounds = array<i64: 1>, scalar_prefetch = 0 : i64, scratch_operands = 0 : i64, tpu.core_type = #tpu.core_type<tc>, window_params = [{pipeline_mode = #tpu.pipeline_mode<synchronous>, transform_indices = @transform_0, window_bounds = array<i64: 8, 512>}, {pipeline_mode = #tpu.pipeline_mode<synchronous>, transform_indices = @transform_1, window_bounds = array<i64: 8, 72>}, {pipeline_mode = #tpu.pipeline_mode<synchronous>, transform_indices = @transform_2, window_bounds = array<i64: 8, 72>}, {pipeline_mode = #tpu.pipeline_mode<synchronous>, transform_indices = @transform_3, window_bounds = array<i64: 9, 512>}, {pipeline_mode = #tpu.pipeline_mode<synchronous>, transform_indices = @transform_4, window_bounds = array<i64: 8, 512>}]} {
    %c0 = arith.constant 0 : index
    %c0_0 = arith.constant 0 : index
    %0 = vector.load %arg1[%c0, %c0_0] : memref<8x512xf32, #tpu.memory_space<vmem>>, vector<8x512xf32>
    %c0_1 = arith.constant 0 : index
    %c0_2 = arith.constant 0 : index
    %1 = vector.load %arg4[%c0_1, %c0_2] : memref<9x512xf32, #tpu.memory_space<vmem>>, vector<1x512xf32>
    %c1 = arith.constant 1 : index
    %c0_3 = arith.constant 0 : index
    %2 = vector.load %arg4[%c1, %c0_3] : memref<9x512xf32, #tpu.memory_space<vmem>>, vector<1x512xf32>
    %c2 = arith.constant 2 : index
    %c0_4 = arith.constant 0 : index
    %3 = vector.load %arg4[%c2, %c0_4] : memref<9x512xf32, #tpu.memory_space<vmem>>, vector<1x512xf32>
    %c3 = arith.constant 3 : index
    %c0_5 = arith.constant 0 : index
    %4 = vector.load %arg4[%c3, %c0_5] : memref<9x512xf32, #tpu.memory_space<vmem>>, vector<1x512xf32>
    %c4 = arith.constant 4 : index
    %c0_6 = arith.constant 0 : index
    %5 = vector.load %arg4[%c4, %c0_6] : memref<9x512xf32, #tpu.memory_space<vmem>>, vector<1x512xf32>
    %c5 = arith.constant 5 : index
    %c0_7 = arith.constant 0 : index
    %6 = vector.load %arg4[%c5, %c0_7] : memref<9x512xf32, #tpu.memory_space<vmem>>, vector<1x512xf32>
    %c6 = arith.constant 6 : index
    %c0_8 = arith.constant 0 : index
    %7 = vector.load %arg4[%c6, %c0_8] : memref<9x512xf32, #tpu.memory_space<vmem>>, vector<1x512xf32>
    %c7 = arith.constant 7 : index
    %c0_9 = arith.constant 0 : index
    %8 = vector.load %arg4[%c7, %c0_9] : memref<9x512xf32, #tpu.memory_space<vmem>>, vector<1x512xf32>
    %c8 = arith.constant 8 : index
    %c0_10 = arith.constant 0 : index
    %9 = vector.load %arg4[%c8, %c0_10] : memref<9x512xf32, #tpu.memory_space<vmem>>, vector<1x512xf32>
    %c0_11 = arith.constant 0 : index
    %c0_12 = arith.constant 0 : index
    %10 = vector.load %arg2[%c0_11, %c0_12] : memref<8x72xf32, #tpu.memory_space<vmem>>, vector<8x72xf32>
    %c17_i32 = arith.constant 17 : i32
    %11 = tpu.dynamic_rotate %0 by %c17_i32 dim 1 : vector<8x512xf32>, i32 -> vector<8x512xf32>
    %12 = vector.broadcast %1 : vector<1x512xf32> to vector<8x512xf32>
    %13 = arith.mulf %11, %12 : vector<8x512xf32>
    %c16_i32 = arith.constant 16 : i32
    %14 = tpu.dynamic_rotate %0 by %c16_i32 dim 1 : vector<8x512xf32>, i32 -> vector<8x512xf32>
    %15 = vector.broadcast %2 : vector<1x512xf32> to vector<8x512xf32>
    %16 = arith.mulf %14, %15 : vector<8x512xf32>
    %c15_i32 = arith.constant 15 : i32
    %17 = tpu.dynamic_rotate %0 by %c15_i32 dim 1 : vector<8x512xf32>, i32 -> vector<8x512xf32>
    %18 = vector.broadcast %3 : vector<1x512xf32> to vector<8x512xf32>
    %19 = arith.mulf %17, %18 : vector<8x512xf32>
    %c1_i32 = arith.constant 1 : i32
    %20 = tpu.dynamic_rotate %0 by %c1_i32 dim 1 : vector<8x512xf32>, i32 -> vector<8x512xf32>
    %21 = vector.broadcast %4 : vector<1x512xf32> to vector<8x512xf32>
    %22 = arith.mulf %20, %21 : vector<8x512xf32>
    %23 = vector.broadcast %5 : vector<1x512xf32> to vector<8x512xf32>
    %24 = arith.mulf %0, %23 : vector<8x512xf32>
    %c511_i32 = arith.constant 511 : i32
    %25 = tpu.dynamic_rotate %0 by %c511_i32 dim 1 : vector<8x512xf32>, i32 -> vector<8x512xf32>
    %26 = vector.broadcast %6 : vector<1x512xf32> to vector<8x512xf32>
    %27 = arith.mulf %25, %26 : vector<8x512xf32>
    %c497_i32 = arith.constant 497 : i32
    %28 = tpu.dynamic_rotate %0 by %c497_i32 dim 1 : vector<8x512xf32>, i32 -> vector<8x512xf32>
    %29 = vector.broadcast %7 : vector<1x512xf32> to vector<8x512xf32>
    %30 = arith.mulf %28, %29 : vector<8x512xf32>
    %c496_i32 = arith.constant 496 : i32
    %31 = tpu.dynamic_rotate %0 by %c496_i32 dim 1 : vector<8x512xf32>, i32 -> vector<8x512xf32>
    %32 = vector.broadcast %8 : vector<1x512xf32> to vector<8x512xf32>
    %33 = arith.mulf %31, %32 : vector<8x512xf32>
    %c495_i32 = arith.constant 495 : i32
    %34 = tpu.dynamic_rotate %0 by %c495_i32 dim 1 : vector<8x512xf32>, i32 -> vector<8x512xf32>
    %35 = vector.broadcast %9 : vector<1x512xf32> to vector<8x512xf32>
    %36 = arith.mulf %34, %35 : vector<8x512xf32>
    %37 = tpu.concatenate %13, %16, %19, %22, %24, %27, %30, %33, %36 in 0 : vector<8x512xf32>, vector<8x512xf32>, vector<8x512xf32>, vector<8x512xf32>, vector<8x512xf32>, vector<8x512xf32>, vector<8x512xf32>, vector<8x512xf32>, vector<8x512xf32> -> vector<72x512xf32>
    %cst = arith.constant dense<0.000000e+00> : vector<8x512xf32>
    %38 = tpu.matmul %10, %37, %cst {dimension_numbers = #tpu.dot_dimension_numbers<[1], [0], [0], [1], [0, 0, 1, 1], [], []>} : vector<8x72xf32>, vector<72x512xf32>, vector<8x512xf32> -> vector<8x512xf32>
    %cst_13 = arith.constant 0.000000e+00 : f32
    %39 = vector.broadcast %cst_13 : f32 to vector<8x512xf32>
    %40 = arith.maximumf %38, %39 : vector<8x512xf32>
    %c0_14 = arith.constant 0 : index
    %c0_15 = arith.constant 0 : index
    %41 = vector.load %arg3[%c0_14, %c0_15] : memref<8x72xf32, #tpu.memory_space<vmem>>, vector<8x72xf32>
    %c17_i32_16 = arith.constant 17 : i32
    %42 = tpu.dynamic_rotate %40 by %c17_i32_16 dim 1 : vector<8x512xf32>, i32 -> vector<8x512xf32>
    %43 = vector.broadcast %1 : vector<1x512xf32> to vector<8x512xf32>
    %44 = arith.mulf %42, %43 : vector<8x512xf32>
    %c16_i32_17 = arith.constant 16 : i32
    %45 = tpu.dynamic_rotate %40 by %c16_i32_17 dim 1 : vector<8x512xf32>, i32 -> vector<8x512xf32>
    %46 = vector.broadcast %2 : vector<1x512xf32> to vector<8x512xf32>
    %47 = arith.mulf %45, %46 : vector<8x512xf32>
    %c15_i32_18 = arith.constant 15 : i32
    %48 = tpu.dynamic_rotate %40 by %c15_i32_18 dim 1 : vector<8x512xf32>, i32 -> vector<8x512xf32>
    %49 = vector.broadcast %3 : vector<1x512xf32> to vector<8x512xf32>
    %50 = arith.mulf %48, %49 : vector<8x512xf32>
    %c1_i32_19 = arith.constant 1 : i32
    %51 = tpu.dynamic_rotate %40 by %c1_i32_19 dim 1 : vector<8x512xf32>, i32 -> vector<8x512xf32>
    %52 = vector.broadcast %4 : vector<1x512xf32> to vector<8x512xf32>
    %53 = arith.mulf %51, %52 : vector<8x512xf32>
    %54 = vector.broadcast %5 : vector<1x512xf32> to vector<8x512xf32>
    %55 = arith.mulf %40, %54 : vector<8x512xf32>
    %c511_i32_20 = arith.constant 511 : i32
    %56 = tpu.dynamic_rotate %40 by %c511_i32_20 dim 1 : vector<8x512xf32>, i32 -> vector<8x512xf32>
    %57 = vector.broadcast %6 : vector<1x512xf32> to vector<8x512xf32>
    %58 = arith.mulf %56, %57 : vector<8x512xf32>
    %c497_i32_21 = arith.constant 497 : i32
    %59 = tpu.dynamic_rotate %40 by %c497_i32_21 dim 1 : vector<8x512xf32>, i32 -> vector<8x512xf32>
    %60 = vector.broadcast %7 : vector<1x512xf32> to vector<8x512xf32>
    %61 = arith.mulf %59, %60 : vector<8x512xf32>
    %c496_i32_22 = arith.constant 496 : i32
    %62 = tpu.dynamic_rotate %40 by %c496_i32_22 dim 1 : vector<8x512xf32>, i32 -> vector<8x512xf32>
    %63 = vector.broadcast %8 : vector<1x512xf32> to vector<8x512xf32>
    %64 = arith.mulf %62, %63 : vector<8x512xf32>
    %c495_i32_23 = arith.constant 495 : i32
    %65 = tpu.dynamic_rotate %40 by %c495_i32_23 dim 1 : vector<8x512xf32>, i32 -> vector<8x512xf32>
    %66 = vector.broadcast %9 : vector<1x512xf32> to vector<8x512xf32>
    %67 = arith.mulf %65, %66 : vector<8x512xf32>
    %68 = tpu.concatenate %44, %47, %50, %53, %55, %58, %61, %64, %67 in 0 : vector<8x512xf32>, vector<8x512xf32>, vector<8x512xf32>, vector<8x512xf32>, vector<8x512xf32>, vector<8x512xf32>, vector<8x512xf32>, vector<8x512xf32>, vector<8x512xf32> -> vector<72x512xf32>
    %cst_24 = arith.constant dense<0.000000e+00> : vector<8x512xf32>
    %69 = tpu.matmul %41, %68, %cst_24 {dimension_numbers = #tpu.dot_dimension_numbers<[1], [0], [0], [1], [0, 0, 1, 1], [], []>} : vector<8x72xf32>, vector<72x512xf32>, vector<8x512xf32> -> vector<8x512xf32>
    %cst_25 = arith.constant 0.000000e+00 : f32
    %70 = vector.broadcast %cst_25 : f32 to vector<8x512xf32>
    %71 = arith.maximumf %69, %70 : vector<8x512xf32>
    %c0_26 = arith.constant 0 : index
    %c0_27 = arith.constant 0 : index
    %72 = vector.load %arg5[%c0_26, %c0_27] : memref<8x512xf32, #tpu.memory_space<vmem>>, vector<8x512xf32>
    tpu.vector_store %arg5[%c0_26, %c0_27], %71 {strides = array<i32>} : memref<8x512xf32, #tpu.memory_space<vmem>>, vector<8x512xf32>,
    return
  }
  func.func @transform_0(%arg0: i32) -> (i32, i32) {
    %c0_i32 = arith.constant 0 : i32
    %c0_i32_0 = arith.constant 0 : i32
    %c0_i32_1 = arith.constant 0 : i32
    return %c0_i32, %c0_i32_0 : i32, i32
  }
  func.func @transform_1(%arg0: i32) -> (i32, i32) {
    %c0_i32 = arith.constant 0 : i32
    %c0_i32_0 = arith.constant 0 : i32
    %c0_i32_1 = arith.constant 0 : i32
    return %c0_i32, %c0_i32_0 : i32, i32
  }
  func.func @transform_2(%arg0: i32) -> (i32, i32) {
    %c0_i32 = arith.constant 0 : i32
    %c0_i32_0 = arith.constant 0 : i32
    %c0_i32_1 = arith.constant 0 : i32
    return %c0_i32, %c0_i32_0 : i32, i32
  }
  func.func @transform_3(%arg0: i32) -> (i32, i32) {
    %c0_i32 = arith.constant 0 : i32
    %c0_i32_0 = arith.constant 0 : i32
    %c0_i32_1 = arith.constant 0 : i32
    return %c0_i32, %c0_i32_0 : i32, i32
  }
  func.func @transform_4(%arg0: i32) -> (i32, i32) {
    %c0_i32 = arith.constant 0 : i32
    %c0_i32_0 = arith.constant 0 : i32
    %c0_i32_1 = arith.constant 0 : i32
    return %c0_i32, %c0_i32_0 : i32, i32
  }
}

</mosaic_0001>

<llo_original>
// kernel: last_block_forward.1
$region0: #{last_block_forward.1}
  #allocation0 [shape = 'u32[]', space=smem, size = 0x4, offset = 0x4, fixed_abs, tag = 'smem constant byte address 0x4 - core index']
  #allocation1 [shape = 'u32[72,128]{1,0:T(1,128)}', space=vmem, size = 0x9000, scoped, tag = 'internal scratch']
  %s0 = inlined_call_operand.vmem [shape: f32[8,512], index: 0, kind: input, shape index: {}]
  %s1 = inlined_call_operand.vmem [shape: f32[8,72], index: 1, kind: input, shape index: {}]
  %s2 = inlined_call_operand.vmem [shape: f32[8,72], index: 2, kind: input, shape index: {}]
  %s3 = inlined_call_operand.vmem [shape: f32[9,512], index: 3, kind: input, shape index: {}]
  %s4 = inlined_call_operand.vmem [shape: f32[8,512], index: 4, kind: output, shape index: {}]
  %s5 = sld [smem:[#allocation0]]
  $region26: #{last_block_forward.1} parent=0
    _
  %s7 = ssub.s32 1, %s5
  %s8 = scalar_select 0, %s7, %s5
  // Predicated region
  $region2: #{last_block_forward.1} parent=0 // pred_check
    _
  $region3: #{last_block_forward.1} parent=0 // pred_check_branch
    %10 = sbr.rel (0) target = $region5
  $region4: #{last_block_forward.1} parent=0 // pred_region
    _
  $region5: #{last_block_forward.1} parent=0 // pred_fallthru
    _
  // Predicated region
  $region6: #{last_block_forward.1} parent=0 // pred_check
    _
  $region7: #{last_block_forward.1} parent=0 // pred_check_branch
    %12 = sbr.rel (0) target = $region9
  $region8: #{last_block_forward.1} parent=0 // pred_region
    _
  $region9: #{last_block_forward.1} parent=0 // pred_fallthru
    _
  // Predicated region
  $region10: #{last_block_forward.1} parent=0 // pred_check
    _
  $region11: #{last_block_forward.1} parent=0 // pred_check_branch
    %14 = sbr.rel (0) target = $region13
  $region12: #{last_block_forward.1} parent=0 // pred_region
    _
  $region13: #{last_block_forward.1} parent=0 // pred_fallthru
    _
  // Predicated region
  $region14: #{last_block_forward.1} parent=0 // pred_check
    _
  $region15: #{last_block_forward.1} parent=0 // pred_check_branch
    %16 = sbr.rel (0) target = $region17
  $region16: #{last_block_forward.1} parent=0 // pred_region
    _
  $region17: #{last_block_forward.1} parent=0 // pred_fallthru
    _
  %v17 = vld [vmem:[%s0] sm:$0xff]
  %v18 = vld [vmem:[%s0 + $0x8] sm:$0xff]
  %v19 = vld [vmem:[%s0 + $0x10] sm:$0xff]
  %v20 = vld [vmem:[%s0 + $0x18] sm:$0xff]
  %v21 = vld [vmem:[%s3] ss:$8 sm:$0xf]
  %s22 = scalar_lea.vmem %s3, 1
  %v23 = vld [vmem:[%s22] ss:$8 sm:$0xf]
  %s24 = scalar_lea.vmem %s3, 2
  %v25 = vld [vmem:[%s24] ss:$8 sm:$0xf]
  %s26 = scalar_lea.vmem %s3, 3
  %v27 = vld [vmem:[%s26] ss:$8 sm:$0xf]
  %s28 = scalar_lea.vmem %s3, 4
  %v29 = vld [vmem:[%s28] ss:$8 sm:$0xf]
  %s30 = scalar_lea.vmem %s3, 5
  %v31 = vld [vmem:[%s30] ss:$8 sm:$0xf]
  %s32 = scalar_lea.vmem %s3, 6
  %v33 = vld [vmem:[%s32] ss:$8 sm:$0xf]
  %s34 = scalar_lea.vmem %s3, 7
  %v35 = vld [vmem:[%s34] ss:$8 sm:$0xf]
  %s36 = scalar_lea.vmem %s3, 32
  %v37 = vld [vmem:[%s36] ss:$8 sm:$0xf]
  %v38 = vld [vmem:[%s1] sm:$0xff]
  %39 = vrot.lane.b32.xlu0 %v17, 17
  %v40 = vpop.permute.xlu0 %39
  %41 = vrot.lane.b32.xlu0 %v18, 17
  %v42 = vpop.permute.xlu0 %41
  %43 = vrot.lane.b32.xlu0 %v19, 17
  %v44 = vpop.permute.xlu0 %43
  %45 = vrot.lane.b32.xlu0 %v20, 17
  %v46 = vpop.permute.xlu0 %45
  %v47 = vlaneseq
  %v48 = vand.u32 %v47, 127
  %vm49 = vcmp.lt.s32.totalorder %v48, 17
  %v50 = vsel %vm49, %v44, %v46
  %v51 = vsel %vm49, %v42, %v44
  %v52 = vsel %vm49, %v40, %v42
  %v53 = vsel %vm49, %v46, %v40
  %v55 = vperm.slane %v21, 0
  %v56 = vperm.slane %v21, 1
  %v57 = vperm.slane %v21, 2
  %v58 = vperm.slane %v21, 3
  %v63 = vmul.f32 %v53, %v55
  %v64 = vmul.f32 %v52, %v56
  %v65 = vmul.f32 %v51, %v57
  %v66 = vmul.f32 %v50, %v58
  %67 = vrot.lane.b32.xlu0 %v17, 16
  %v68 = vpop.permute.xlu0 %67
  %69 = vrot.lane.b32.xlu0 %v18, 16
  %v70 = vpop.permute.xlu0 %69
  %71 = vrot.lane.b32.xlu0 %v19, 16
  %v72 = vpop.permute.xlu0 %71
  %73 = vrot.lane.b32.xlu0 %v20, 16
  %v74 = vpop.permute.xlu0 %73
  %vm75 = vcmp.lt.s32.totalorder %v48, 16
  %v76 = vsel %vm75, %v72, %v74
  %v77 = vsel %vm75, %v70, %v72
  %v78 = vsel %vm75, %v68, %v70
  %v79 = vsel %vm75, %v74, %v68
  %v81 = vperm.slane %v23, 0
  %v82 = vperm.slane %v23, 1
  %v83 = vperm.slane %v23, 2
  %v84 = vperm.slane %v23, 3
  %v89 = vmul.f32 %v79, %v81
  %v90 = vmul.f32 %v78, %v82
  %v91 = vmul.f32 %v77, %v83
  %v92 = vmul.f32 %v76, %v84
  %93 = vrot.lane.b32.xlu0 %v17, 15
  %v94 = vpop.permute.xlu0 %93
  %95 = vrot.lane.b32.xlu0 %v18, 15
  %v96 = vpop.permute.xlu0 %95
  %97 = vrot.lane.b32.xlu0 %v19, 15
  %v98 = vpop.permute.xlu0 %97
  %99 = vrot.lane.b32.xlu0 %v20, 15
  %v100 = vpop.permute.xlu0 %99
  %vm101 = vcmp.lt.s32.totalorder %v48, 15
  %v102 = vsel %vm101, %v98, %v100
  %v103 = vsel %vm101, %v96, %v98
  %v104 = vsel %vm101, %v94, %v96
  %v105 = vsel %vm101, %v100, %v94
  %v107 = vperm.slane %v25, 0
  %v108 = vperm.slane %v25, 1
  %v109 = vperm.slane %v25, 2
  %v110 = vperm.slane %v25, 3
  %v115 = vmul.f32 %v105, %v107
  %v116 = vmul.f32 %v104, %v108
  %v117 = vmul.f32 %v103, %v109
  %v118 = vmul.f32 %v102, %v110
  %119 = vrot.lane.b32.xlu0 %v17, 1
  %v120 = vpop.permute.xlu0 %119
  %121 = vrot.lane.b32.xlu0 %v18, 1
  %v122 = vpop.permute.xlu0 %121
  %123 = vrot.lane.b32.xlu0 %v19, 1
  %v124 = vpop.permute.xlu0 %123
  %125 = vrot.lane.b32.xlu0 %v20, 1
  %v126 = vpop.permute.xlu0 %125
  %vm127 = vcmp.lt.s32.totalorder %v48, 1
  %v128 = vsel %vm127, %v124, %v126
  %v129 = vsel %vm127, %v122, %v124
  %v130 = vsel %vm127, %v120, %v122
  %v131 = vsel %vm127, %v126, %v120
  %v133 = vperm.slane %v27, 0
  %v134 = vperm.slane %v27, 1
  %v135 = vperm.slane %v27, 2
  %v136 = vperm.slane %v27, 3
  %v141 = vmul.f32 %v131, %v133
  %v142 = vmul.f32 %v130, %v134
  %v143 = vmul.f32 %v129, %v135
  %v144 = vmul.f32 %v128, %v136
  %v146 = vperm.slane %v29, 0
  %v147 = vperm.slane %v29, 1
  %v148 = vperm.slane %v29, 2
  %v149 = vperm.slane %v29, 3
  %v154 = vmul.f32 %v17, %v146
  %v155 = vmul.f32 %v18, %v147
  %v156 = vmul.f32 %v19, %v148
  %v157 = vmul.f32 %v20, %v149
  %158 = vrot.lane.b32.xlu0 %v17, 127
  %v159 = vpop.permute.xlu0 %158
  %160 = vrot.lane.b32.xlu0 %v18, 127
  %v161 = vpop.permute.xlu0 %160
  %162 = vrot.lane.b32.xlu0 %v19, 127
  %v163 = vpop.permute.xlu0 %162
  %164 = vrot.lane.b32.xlu0 %v20, 127
  %v165 = vpop.permute.xlu0 %164
  %vm166 = vcmp.lt.s32.totalorder %v48, 127
  %v167 = vsel %vm166, %v163, %v165
  %v168 = vsel %vm166, %v161, %v163
  %v169 = vsel %vm166, %v159, %v161
  %v170 = vsel %vm166, %v165, %v159
  %v172 = vperm.slane %v31, 0
  %v173 = vperm.slane %v31, 1
  %v174 = vperm.slane %v31, 2
  %v175 = vperm.slane %v31, 3
  %v180 = vmul.f32 %v169, %v172
  %v181 = vmul.f32 %v168, %v173
  %v182 = vmul.f32 %v167, %v174
  %v183 = vmul.f32 %v170, %v175
  %184 = vrot.lane.b32.xlu0 %v17, 113
  %v185 = vpop.permute.xlu0 %184
  %186 = vrot.lane.b32.xlu0 %v18, 113
  %v187 = vpop.permute.xlu0 %186
  %188 = vrot.lane.b32.xlu0 %v19, 113
  %v189 = vpop.permute.xlu0 %188
  %190 = vrot.lane.b32.xlu0 %v20, 113
  %v191 = vpop.permute.xlu0 %190
  %vm192 = vcmp.lt.s32.totalorder %v48, 113
  %v193 = vsel %vm192, %v189, %v191
  %v194 = vsel %vm192, %v187, %v189
  %v195 = vsel %vm192, %v185, %v187
  %v196 = vsel %vm192, %v191, %v185
  %v198 = vperm.slane %v33, 0
  %v199 = vperm.slane %v33, 1
  %v200 = vperm.slane %v33, 2
  %v201 = vperm.slane %v33, 3
  %v206 = vmul.f32 %v195, %v198
  %v207 = vmul.f32 %v194, %v199
  %v208 = vmul.f32 %v193, %v200
  %v209 = vmul.f32 %v196, %v201
  %210 = vrot.lane.b32.xlu0 %v17, 112
  %v211 = vpop.permute.xlu0 %210
  %212 = vrot.lane.b32.xlu0 %v18, 112
  %v213 = vpop.permute.xlu0 %212
  %214 = vrot.lane.b32.xlu0 %v19, 112
  %v215 = vpop.permute.xlu0 %214
  %216 = vrot.lane.b32.xlu0 %v20, 112
  %v217 = vpop.permute.xlu0 %216
  %vm218 = vcmp.lt.s32.totalorder %v48, 112
  %v219 = vsel %vm218, %v215, %v217
  %v220 = vsel %vm218, %v213, %v215
  %v221 = vsel %vm218, %v211, %v213
  %v222 = vsel %vm218, %v217, %v211
  %v224 = vperm.slane %v35, 0
  %v225 = vperm.slane %v35, 1
  %v226 = vperm.slane %v35, 2
  %v227 = vperm.slane %v35, 3
  %v232 = vmul.f32 %v221, %v224
  %v233 = vmul.f32 %v220, %v225
  %v234 = vmul.f32 %v219, %v226
  %v235 = vmul.f32 %v222, %v227
  %236 = vrot.lane.b32.xlu0 %v17, 111
  %v237 = vpop.permute.xlu0 %236
  %238 = vrot.lane.b32.xlu0 %v18, 111
  %v239 = vpop.permute.xlu0 %238
  %240 = vrot.lane.b32.xlu0 %v19, 111
  %v241 = vpop.permute.xlu0 %240
  %242 = vrot.lane.b32.xlu0 %v20, 111
  %v243 = vpop.permute.xlu0 %242
  %vm244 = vcmp.lt.s32.totalorder %v48, 111
  %v245 = vsel %vm244, %v241, %v243
  %v246 = vsel %vm244, %v239, %v241
  %v247 = vsel %vm244, %v237, %v239
  %v248 = vsel %vm244, %v243, %v237
  %v250 = vperm.slane %v37, 0
  %v251 = vperm.slane %v37, 1
  %v252 = vperm.slane %v37, 2
  %v253 = vperm.slane %v37, 3
  %v258 = vmul.f32 %v247, %v250
  %v259 = vmul.f32 %v246, %v251
  %v260 = vmul.f32 %v245, %v252
  %v261 = vmul.f32 %v248, %v253
  %vm262 = vcmask 588800
  %v264 = vsel %vm262, %v38, 0
  %266 = vmatpush.msra.mxu0 0.0
  %267 = vmatpush.msra.mxu0 0.0
  %268 = vmatpush.msra.mxu0 0.0
  %269 = vmatpush.msra.mxu0 0.0
  %270 = vmatpush.msra.mxu0 0.0
  %271 = vmatpush.msra.mxu0 0.0
  %272 = vmatpush.msra.mxu0 0.0
  %273 = vmatpush.msra.mxu0 %v258
  %274 = vmatpush.msra.mxu0 %v232
  %275 = vmatpush.msra.mxu0 %v206
  %276 = vmatpush.msra.mxu0 %v180
  %277 = vmatpush.msra.mxu0 %v154
  %278 = vmatpush.msra.mxu0 %v141
  %279 = vmatpush.msra.mxu0 %v115
  %280 = vmatpush.msra.mxu0 %v89
  %281 = vmatpush.msra.mxu0 %v63
  %282 = vmatmul.f32.gmra.mxu0 %v264
  %v283 = vpop.f32.mrf.mxu0
  %v284 = vadd.f32 0.0, %v283
  %285 = vdwg.mxu0
  %286 = vmatpush.msra.mxu0 0.0
  %287 = vmatpush.msra.mxu0 0.0
  %288 = vmatpush.msra.mxu0 0.0
  %289 = vmatpush.msra.mxu0 0.0
  %290 = vmatpush.msra.mxu0 0.0
  %291 = vmatpush.msra.mxu0 0.0
  %292 = vmatpush.msra.mxu0 0.0
  %293 = vmatpush.msra.mxu0 %v259
  %294 = vmatpush.msra.mxu0 %v233
  %295 = vmatpush.msra.mxu0 %v207
  %296 = vmatpush.msra.mxu0 %v181
  %297 = vmatpush.msra.mxu0 %v155
  %298 = vmatpush.msra.mxu0 %v142
  %299 = vmatpush.msra.mxu0 %v116
  %300 = vmatpush.msra.mxu0 %v90
  %301 = vmatpush.msra.mxu0 %v64
  %302 = vmatmul.f32.gmra.mxu0 %v264
  %v303 = vpop.f32.mrf.mxu0
  %v304 = vadd.f32 0.0, %v303
  %305 = vdwg.mxu0
  %306 = vmatpush.msra.mxu0 0.0
  %307 = vmatpush.msra.mxu0 0.0
  %308 = vmatpush.msra.mxu0 0.0
  %309 = vmatpush.msra.mxu0 0.0
  %310 = vmatpush.msra.mxu0 0.0
  %311 = vmatpush.msra.mxu0 0.0
  %312 = vmatpush.msra.mxu0 0.0
  %313 = vmatpush.msra.mxu0 %v260
  %314 = vmatpush.msra.mxu0 %v234
  %315 = vmatpush.msra.mxu0 %v208
  %316 = vmatpush.msra.mxu0 %v182
  %317 = vmatpush.msra.mxu0 %v156
  %318 = vmatpush.msra.mxu0 %v143
  %319 = vmatpush.msra.mxu0 %v117
  %320 = vmatpush.msra.mxu0 %v91
  %321 = vmatpush.msra.mxu0 %v65
  %322 = vmatmul.f32.gmra.mxu0 %v264
  %v323 = vpop.f32.mrf.mxu0
  %v324 = vadd.f32 0.0, %v323
  %325 = vdwg.mxu0
  %326 = vmatpush.msra.mxu0 0.0
  %327 = vmatpush.msra.mxu0 0.0
  %328 = vmatpush.msra.mxu0 0.0
  %329 = vmatpush.msra.mxu0 0.0
  %330 = vmatpush.msra.mxu0 0.0
  %331 = vmatpush.msra.mxu0 0.0
  %332 = vmatpush.msra.mxu0 0.0
  %333 = vmatpush.msra.mxu0 %v261
  %334 = vmatpush.msra.mxu0 %v235
  %335 = vmatpush.msra.mxu0 %v209
  %336 = vmatpush.msra.mxu0 %v183
  %337 = vmatpush.msra.mxu0 %v157
  %338 = vmatpush.msra.mxu0 %v144
  %339 = vmatpush.msra.mxu0 %v118
  %340 = vmatpush.msra.mxu0 %v92
  %341 = vmatpush.msra.mxu0 %v66
  %342 = vmatmul.f32.gmra.mxu0 %v264
  %v343 = vpop.f32.mrf.mxu0
  %v344 = vadd.f32 0.0, %v343
  %345 = vdwg.mxu0
  %v346 = vmax.f32 %v284, 0.0
  %v347 = vmax.f32 %v304, 0.0
  %v348 = vmax.f32 %v324, 0.0
  %v349 = vmax.f32 %v344, 0.0
  %v350 = vld [vmem:[%s2] sm:$0xff]
  %351 = vrot.lane.b32.xlu0 %v346, 17
  %v352 = vpop.permute.xlu0 %351
  %353 = vrot.lane.b32.xlu0 %v347, 17
  %v354 = vpop.permute.xlu0 %353
  %355 = vrot.lane.b32.xlu0 %v348, 17
  %v356 = vpop.permute.xlu0 %355
  %357 = vrot.lane.b32.xlu0 %v349, 17
  %v358 = vpop.permute.xlu0 %357
  %v359 = vsel %vm49, %v356, %v358
  %v360 = vsel %vm49, %v354, %v356
  %v361 = vsel %vm49, %v352, %v354
  %v362 = vsel %vm49, %v358, %v352
  %v363 = vmul.f32 %v362, %v55
  %v364 = vmul.f32 %v361, %v56
  %v365 = vmul.f32 %v360, %v57
  %v366 = vmul.f32 %v359, %v58
  %367 = vrot.lane.b32.xlu0 %v346, 16
  %v368 = vpop.permute.xlu0 %367
  %369 = vrot.lane.b32.xlu0 %v347, 16
  %v370 = vpop.permute.xlu0 %369
  %371 = vrot.lane.b32.xlu0 %v348, 16
  %v372 = vpop.permute.xlu0 %371
  %373 = vrot.lane.b32.xlu0 %v349, 16
  %v374 = vpop.permute.xlu0 %373
  %v375 = vsel %vm75, %v372, %v374
  %v376 = vsel %vm75, %v370, %v372
  %v377 = vsel %vm75, %v368, %v370
  %v378 = vsel %vm75, %v374, %v368
  %v379 = vmul.f32 %v378, %v81
  %v380 = vmul.f32 %v377, %v82
  %v381 = vmul.f32 %v376, %v83
  %v382 = vmul.f32 %v375, %v84
  %383 = vrot.lane.b32.xlu0 %v346, 15
  %v384 = vpop.permute.xlu0 %383
  %385 = vrot.lane.b32.xlu0 %v347, 15
  %v386 = vpop.permute.xlu0 %385
  %387 = vrot.lane.b32.xlu0 %v348, 15
  %v388 = vpop.permute.xlu0 %387
  %389 = vrot.lane.b32.xlu0 %v349, 15
  %v390 = vpop.permute.xlu0 %389
  %v391 = vsel %vm101, %v388, %v390
  %v392 = vsel %vm101, %v386, %v388
  %v393 = vsel %vm101, %v384, %v386
  %v394 = vsel %vm101, %v390, %v384
  %v395 = vmul.f32 %v394, %v107
  %v396 = vmul.f32 %v393, %v108
  %v397 = vmul.f32 %v392, %v109
  %v398 = vmul.f32 %v391, %v110
  %399 = vrot.lane.b32.xlu0 %v346, 1
  %v400 = vpop.permute.xlu0 %399
  %401 = vrot.lane.b32.xlu0 %v347, 1
  %v402 = vpop.permute.xlu0 %401
  %403 = vrot.lane.b32.xlu0 %v348, 1
  %v404 = vpop.permute.xlu0 %403
  %405 = vrot.lane.b32.xlu0 %v349, 1
  %v406 = vpop.permute.xlu0 %405
  %v407 = vsel %vm127, %v404, %v406
  %v408 = vsel %vm127, %v402, %v404
  %v409 = vsel %vm127, %v400, %v402
  %v410 = vsel %vm127, %v406, %v400
  %v411 = vmul.f32 %v410, %v133
  %v412 = vmul.f32 %v409, %v134
  %v413 = vmul.f32 %v408, %v135
  %v414 = vmul.f32 %v407, %v136
  %v415 = vmul.f32 %v346, %v146
  %v416 = vmul.f32 %v347, %v147
  %v417 = vmul.f32 %v348, %v148
  %v418 = vmul.f32 %v349, %v149
  %419 = vrot.lane.b32.xlu0 %v346, 127
  %v420 = vpop.permute.xlu0 %419
  %421 = vrot.lane.b32.xlu0 %v347, 127
  %v422 = vpop.permute.xlu0 %421
  %423 = vrot.lane.b32.xlu0 %v348, 127
  %v424 = vpop.permute.xlu0 %423
  %425 = vrot.lane.b32.xlu0 %v349, 127
  %v426 = vpop.permute.xlu0 %425
  %v427 = vsel %vm166, %v424, %v426
  %v428 = vsel %vm166, %v422, %v424
  %v429 = vsel %vm166, %v420, %v422
  %v430 = vsel %vm166, %v426, %v420
  %v431 = vmul.f32 %v429, %v172
  %v432 = vmul.f32 %v428, %v173
  %v433 = vmul.f32 %v427, %v174
  %v434 = vmul.f32 %v430, %v175
  %435 = vrot.lane.b32.xlu0 %v346, 113
  %v436 = vpop.permute.xlu0 %435
  %437 = vrot.lane.b32.xlu0 %v347, 113
  %v438 = vpop.permute.xlu0 %437
  %439 = vrot.lane.b32.xlu0 %v348, 113
  %v440 = vpop.permute.xlu0 %439
  %441 = vrot.lane.b32.xlu0 %v349, 113
  %v442 = vpop.permute.xlu0 %441
  %v443 = vsel %vm192, %v440, %v442
  %v444 = vsel %vm192, %v438, %v440
  %v445 = vsel %vm192, %v436, %v438
  %v446 = vsel %vm192, %v442, %v436
  %v447 = vmul.f32 %v445, %v198
  %v448 = vmul.f32 %v444, %v199
  %v449 = vmul.f32 %v443, %v200
  %v450 = vmul.f32 %v446, %v201
  %451 = vrot.lane.b32.xlu0 %v346, 112
  %v452 = vpop.permute.xlu0 %451
  %453 = vrot.lane.b32.xlu0 %v347, 112
  %v454 = vpop.permute.xlu0 %453
  %455 = vrot.lane.b32.xlu0 %v348, 112
  %v456 = vpop.permute.xlu0 %455
  %457 = vrot.lane.b32.xlu0 %v349, 112
  %v458 = vpop.permute.xlu0 %457
  %v459 = vsel %vm218, %v456, %v458
  %v460 = vsel %vm218, %v454, %v456
  %v461 = vsel %vm218, %v452, %v454
  %v462 = vsel %vm218, %v458, %v452
  %v463 = vmul.f32 %v461, %v224
  %v464 = vmul.f32 %v460, %v225
  %v465 = vmul.f32 %v459, %v226
  %v466 = vmul.f32 %v462, %v227
  %467 = vrot.lane.b32.xlu0 %v346, 111
  %v468 = vpop.permute.xlu0 %467
  %469 = vrot.lane.b32.xlu0 %v347, 111
  %v470 = vpop.permute.xlu0 %469
  %471 = vrot.lane.b32.xlu0 %v348, 111
  %v472 = vpop.permute.xlu0 %471
  %473 = vrot.lane.b32.xlu0 %v349, 111
  %v474 = vpop.permute.xlu0 %473
  %v475 = vsel %vm244, %v472, %v474
  %v476 = vsel %vm244, %v470, %v472
  %v477 = vsel %vm244, %v468, %v470
  %v478 = vsel %vm244, %v474, %v468
  %v479 = vmul.f32 %v477, %v250
  %v480 = vmul.f32 %v476, %v251
  %v481 = vmul.f32 %v475, %v252
  %v482 = vmul.f32 %v478, %v253
  %v484 = vsel %vm262, %v350, 0
  %486 = vmatpush.msra.mxu0 0.0
  %487 = vmatpush.msra.mxu0 0.0
  %488 = vmatpush.msra.mxu0 0.0
  %489 = vmatpush.msra.mxu0 0.0
  %490 = vmatpush.msra.mxu0 0.0
  %491 = vmatpush.msra.mxu0 0.0
  %492 = vmatpush.msra.mxu0 0.0
  %493 = vmatpush.msra.mxu0 %v479
  %494 = vmatpush.msra.mxu0 %v463
  %495 = vmatpush.msra.mxu0 %v447
  %496 = vmatpush.msra.mxu0 %v431
  %497 = vmatpush.msra.mxu0 %v415
  %498 = vmatpush.msra.mxu0 %v411
  %499 = vmatpush.msra.mxu0 %v395
  %500 = vmatpush.msra.mxu0 %v379
  %501 = vmatpush.msra.mxu0 %v363
  %502 = vmatmul.f32.gmra.mxu0 %v484
  %v503 = vpop.f32.mrf.mxu0
  %v504 = vadd.f32 0.0, %v503
  %505 = vdwg.mxu0
  %506 = vmatpush.msra.mxu0 0.0
  %507 = vmatpush.msra.mxu0 0.0
  %508 = vmatpush.msra.mxu0 0.0
  %509 = vmatpush.msra.mxu0 0.0
  %510 = vmatpush.msra.mxu0 0.0
  %511 = vmatpush.msra.mxu0 0.0
  %512 = vmatpush.msra.mxu0 0.0
  %513 = vmatpush.msra.mxu0 %v480
  %514 = vmatpush.msra.mxu0 %v464
  %515 = vmatpush.msra.mxu0 %v448
  %516 = vmatpush.msra.mxu0 %v432
  %517 = vmatpush.msra.mxu0 %v416
  %518 = vmatpush.msra.mxu0 %v412
  %519 = vmatpush.msra.mxu0 %v396
  %520 = vmatpush.msra.mxu0 %v380
  %521 = vmatpush.msra.mxu0 %v364
  %522 = vmatmul.f32.gmra.mxu0 %v484
  %v523 = vpop.f32.mrf.mxu0
  %v524 = vadd.f32 0.0, %v523
  %525 = vdwg.mxu0
  %526 = vmatpush.msra.mxu0 0.0
  %527 = vmatpush.msra.mxu0 0.0
  %528 = vmatpush.msra.mxu0 0.0
  %529 = vmatpush.msra.mxu0 0.0
  %530 = vmatpush.msra.mxu0 0.0
  %531 = vmatpush.msra.mxu0 0.0
  %532 = vmatpush.msra.mxu0 0.0
  %533 = vmatpush.msra.mxu0 %v481
  %534 = vmatpush.msra.mxu0 %v465
  %535 = vmatpush.msra.mxu0 %v449
  %536 = vmatpush.msra.mxu0 %v433
  %537 = vmatpush.msra.mxu0 %v417
  %538 = vmatpush.msra.mxu0 %v413
  %539 = vmatpush.msra.mxu0 %v397
  %540 = vmatpush.msra.mxu0 %v381
  %541 = vmatpush.msra.mxu0 %v365
  %542 = vmatmul.f32.gmra.mxu0 %v484
  %v543 = vpop.f32.mrf.mxu0
  %v544 = vadd.f32 0.0, %v543
  %545 = vdwg.mxu0
  %546 = vmatpush.msra.mxu0 0.0
  %547 = vmatpush.msra.mxu0 0.0
  %548 = vmatpush.msra.mxu0 0.0
  %549 = vmatpush.msra.mxu0 0.0
  %550 = vmatpush.msra.mxu0 0.0
  %551 = vmatpush.msra.mxu0 0.0
  %552 = vmatpush.msra.mxu0 0.0
  %553 = vmatpush.msra.mxu0 %v482
  %554 = vmatpush.msra.mxu0 %v466
  %555 = vmatpush.msra.mxu0 %v450
  %556 = vmatpush.msra.mxu0 %v434
  %557 = vmatpush.msra.mxu0 %v418
  %558 = vmatpush.msra.mxu0 %v414
  %559 = vmatpush.msra.mxu0 %v398
  %560 = vmatpush.msra.mxu0 %v382
  %561 = vmatpush.msra.mxu0 %v366
  %562 = vmatmul.f32.gmra.mxu0 %v484
  %v563 = vpop.f32.mrf.mxu0
  %v564 = vadd.f32 0.0, %v563
  %565 = vdwg.mxu0
  %v566 = vmax.f32 %v504, 0.0
  %v567 = vmax.f32 %v524, 0.0
  %v568 = vmax.f32 %v544, 0.0
  %v569 = vmax.f32 %v564, 0.0
  %570 = vst [vmem:[%s4] sm:$0xff] %v566
  %571 = vst [vmem:[%s4 + $0x8] sm:$0xff] %v567
  %572 = vst [vmem:[%s4 + $0x10] sm:$0xff] %v568
  %573 = vst [vmem:[%s4 + $0x18] sm:$0xff] %v569
  // Predicated region
  $region18: #{last_block_forward.1} parent=0 // pred_check
    _
  $region19: #{last_block_forward.1} parent=0 // pred_check_branch
    %575 = sbr.rel (0) target = $region21
  $region20: #{last_block_forward.1} parent=0 // pred_region
    _
  $region21: #{last_block_forward.1} parent=0 // pred_fallthru
    _
  // Predicated region
  $region22: #{last_block_forward.1} parent=0 // pred_check
    _
  $region23: #{last_block_forward.1} parent=0 // pred_check_branch
    %577 = sbr.rel (0) target = $region25
  $region24: #{last_block_forward.1} parent=0 // pred_region
    _
  $region25: #{last_block_forward.1} parent=0 // pred_fallthru
    _

</llo_original>
